<compile_context>
chip_gen: v5e
topology: v5e:2x2
jax: 0.10.0
libtpu: 0.0.40
codegen_flags: <defaults>
</compile_context>

<pallas_src>
import functools

import jax
import jax.numpy as jnp
from jax.experimental import pallas as pl
from jax.experimental.pallas import tpu as pltpu

K_IN = 49            # flattened 7x7 input
HIDDEN = 32 * 5 * 5  # 800, flattened conv output (PyTorch (C,H,W) order)


def _round_up(n, m):
    return ((n + m - 1) // m) * m


# ------------------------------ Pallas kernel -------------------------------

def encoder_fused_kernel(x_ref, wc_ref, oc_ref, wl_ref, bl_ref, o_ref,
                         *, hidden, hidden_chunk, compute_dtype):
    # x_ref:  [bm, 49]       flattened 7x7 input block (compute dtype)
    # wc_ref: [49, 800]      conv-as-matmul weight, BN scale folded (compute dtype)
    # oc_ref: [1, 800]       folded conv-bias + BN offset (f32)
    # wl_ref: [800, Dp]      linear weight, transposed + lane-padded (compute dtype)
    # bl_ref: [1, Dp]        linear bias, lane-padded (f32)
    # o_ref:  [bm, Dp]       output block (f32)
    x = x_ref[...]
    acc = jnp.zeros(o_ref.shape, jnp.float32)
    # Static (fully unrolled) chunk loop over the hidden dim; a single iteration
    # when hidden_chunk == hidden (small row blocks).
    for lo in range(0, hidden, hidden_chunk):
        hi = min(lo + hidden_chunk, hidden)
        h = jnp.dot(x, wc_ref[:, lo:hi], preferred_element_type=jnp.float32)
        h = jnp.maximum(h + oc_ref[:, lo:hi], 0.0)          # conv + BN + ReLU (f32)
        acc = acc + jnp.dot(h.astype(compute_dtype), wl_ref[lo:hi, :],
                            preferred_element_type=jnp.float32)
    o_ref[...] = jnp.maximum(acc + bl_ref[...], 0.0)         # linear + ReLU (f32)


# ---------------------------- parameter folding -----------------------------

def prepare_params(params, *, compute_dtype=jnp.bfloat16):
    """One-time prep: fold eval-mode BN into the conv, expand the conv to a
    [49, 800] matmul whose columns are already in PyTorch Flatten (C, H, W)
    order, pad the linear layer to a lane-dense (multiple of 128) width, and
    cast the matmul operands to the compute dtype (bias/offset stay f32)."""
    eps = 1e-5
    affine = params["bn_gamma"] / jnp.sqrt(params["bn_var"] + eps)     # [32]

    # BN scale folded into the conv taps.
    w = params["conv_w"][:, 0] * affine[:, None, None]                 # [32,3,3]

    # Dense conv-as-matmul matrix W[ih, iw, c, oh, ow] = w[c, ih-oh, iw-ow].
    eye5 = jnp.eye(5, dtype=jnp.float32)
    W = jnp.zeros((7, 7, 32, 5, 5), jnp.float32)
    for ki in range(3):
        for kj in range(3):
            contrib = jnp.einsum("ab,cd,k->ackbd", eye5, eye5, w[:, ki, kj])
            W = W.at[ki:ki + 5, kj:kj + 5].add(contrib)
    w_conv = W.reshape(K_IN, HIDDEN)                                   # [49, 800]

    # Per-channel offset (conv bias + BN shift), repeated over the 25 positions.
    off_c = affine * (params["conv_b"] - params["bn_mean"]) + params["bn_beta"]
    offset = jnp.repeat(off_c, 25).reshape(1, HIDDEN)                  # [1, 800]

    # Linear layer: transpose and zero-pad the output dim to a full lane tile.
    d_out = params["lin_w"].shape[0]
    d_pad = _round_up(d_out, 128)
    lin_w = params["lin_w"].T                                          # [800, D]
    lin_b = params["lin_b"]
    if d_pad != d_out:
        lin_w = jnp.pad(lin_w, ((0, 0), (0, d_pad - d_out)))
        lin_b = jnp.pad(lin_b, (0, d_pad - d_out))

    return {
        "w_conv": w_conv.astype(compute_dtype),     # [49, 800]
        "offset": offset.astype(jnp.float32),       # [1, 800]
        "lin_w": lin_w.astype(compute_dtype),       # [800, Dp]
        "lin_b": lin_b.reshape(1, d_pad).astype(jnp.float32),   # [1, Dp]
        "d_out": d_out,                              # static python int
    }


# ------------------------------ forward pass --------------------------------

def encoder2_forward(x, prepped, *, block_rows=1024, hidden_chunk=None):
    """x: [B, 1, 7, 7] float32 (NCHW, like PyTorch). Returns [B, D] float32."""
    B = x.shape[0]
    assert x.shape[1:] == (1, 7, 7)
    compute_dtype = prepped["w_conv"].dtype
    d_pad = prepped["lin_w"].shape[1]
    d_out = prepped["d_out"]

    # Free reshape (no transpose) + one-time cast to the matmul compute dtype.
    xf = x.reshape(B, K_IN).astype(compute_dtype)

    # Row-block over the batch; weights stay resident (constant index_map).
    # For B > 16 always produce >= 2 blocks so ("parallel",) can shard the batch
    # axis across v7x's two TensorCores; cap at block_rows to bound VMEM.
    if B <= 16:
        bm = B
    else:
        bm = min(block_rows, max(16, _round_up(pl.cdiv(B, 2), 16)))
    grid = (pl.cdiv(B, bm),)

    # Small row blocks: single-shot hidden dim. Large row blocks: chunk the
    # 800-wide hidden dim so the intermediate streams through vregs.
    if hidden_chunk is None:
        hidden_chunk = HIDDEN if bm <= 256 else 256

    kernel = functools.partial(encoder_fused_kernel, hidden=HIDDEN,
                               hidden_chunk=hidden_chunk,
                               compute_dtype=compute_dtype)

    out = pl.pallas_call(
        kernel,
        out_shape=jax.ShapeDtypeStruct((B, d_pad), jnp.float32),
        grid_spec=pltpu.PrefetchScalarGridSpec(
            num_scalar_prefetch=0,
            grid=grid,
            in_specs=[
                pl.BlockSpec((bm, K_IN), lambda i: (i, 0)),       # x block
                pl.BlockSpec((K_IN, HIDDEN), lambda i: (0, 0)),   # resident weights
                pl.BlockSpec((1, HIDDEN), lambda i: (0, 0)),
                pl.BlockSpec((HIDDEN, d_pad), lambda i: (0, 0)),
                pl.BlockSpec((1, d_pad), lambda i: (0, 0)),
            ],
            out_specs=pl.BlockSpec((bm, d_pad), lambda i: (i, 0)),
        ),
        compiler_params=pltpu.CompilerParams(
            dimension_semantics=("parallel",)),      # shards across v7x's 2 TCs
    )(xf, prepped["w_conv"], prepped["offset"],
      prepped["lin_w"], prepped["lin_b"])

    return out[:, :d_out] if d_pad != d_out else out


# --------------------------- parameter creation -----------------------------

def make_params(key, encoded_space_dim):
    ks = jax.random.split(key, 8)
    return {
        "conv_w": jax.random.normal(ks[0], (32, 1, 3, 3), jnp.float32) * 0.3,
        "conv_b": jax.random.normal(ks[1], (32,), jnp.float32) * 0.1,
        "bn_gamma": 1.0 + 0.1 * jax.random.normal(ks[2], (32,), jnp.float32),
        "bn_beta": 0.1 * jax.random.normal(ks[3], (32,), jnp.float32),
        "bn_mean": 0.05 * jax.random.normal(ks[4], (32,), jnp.float32),
        "bn_var": 1.0 + 0.1 * jax.random.uniform(ks[5], (32,), jnp.float32),
        "lin_w": jax.random.normal(ks[6], (encoded_space_dim, HIDDEN),
                                   jnp.float32) * 0.03,
        "lin_b": jax.random.normal(ks[7], (encoded_space_dim,),
                                   jnp.float32) * 0.1,
    }


# -------------------------------- references --------------------------------

def encoder2_reference(x, params):
    """Pure-JAX f32 reference of the original module (conv/BN/ReLU/flat/lin)."""
    B = x.shape[0]
    y = jax.lax.conv_general_dilated(
        x, params["conv_w"], window_strides=(1, 1), padding="VALID",
        dimension_numbers=("NCHW", "OIHW", "NCHW"))
    y = y + params["conv_b"].reshape(1, 32, 1, 1)
    eps = 1e-5
    y = (y - params["bn_mean"].reshape(1, 32, 1, 1)) / jnp.sqrt(
        params["bn_var"].reshape(1, 32, 1, 1) + eps)
    y = y * params["bn_gamma"].reshape(1, 32, 1, 1) + \
        params["bn_beta"].reshape(1, 32, 1, 1)
    y = jnp.maximum(y, 0.0)
    y = y.reshape(B, -1)                     # PyTorch Flatten: (C, H, W) order
    y = y @ params["lin_w"].T + params["lin_b"]
    return jnp.maximum(y, 0.0)


def encoder2_folded_reference(x, prepped):
    """jnp reference using the SAME folded (possibly bf16) weights as the
    kernel, so the kernel plumbing can be checked at tight tolerance."""
    B = x.shape[0]
    dt = prepped["w_conv"].dtype
    xf = x.reshape(B, K_IN).astype(dt)
    h = jnp.dot(xf, prepped["w_conv"], preferred_element_type=jnp.float32)
    h = jnp.maximum(h + prepped["offset"], 0.0)
    y = jnp.dot(h.astype(dt), prepped["lin_w"],
                preferred_element_type=jnp.float32)
    y = jnp.maximum(y + prepped["lin_b"], 0.0)
    return y[:, :prepped["d_out"]]


# ---------------------------------- main -------------------------------------

if __name__ == "__main__":
    key = jax.random.PRNGKey(0)
    k_x, k_p, k_x2 = jax.random.split(key, 3)

    B, D = 2, 16
    # Linear(32*5*5, D) implies conv output 5x5 -> input spatial 7x7, 1 channel.
    x = jax.random.normal(k_x, (B, 1, 7, 7), jnp.float32)
    params = make_params(k_p, D)
    ref = jax.block_until_ready(encoder2_reference(x, params))

    # 1) f32 path: exact check of BN fold + conv-as-matmul + kernel vs reference.
    prepped_f32 = prepare_params(params, compute_dtype=jnp.float32)
    out_f32 = jax.block_until_ready(encoder2_forward(x, prepped_f32))
    assert out_f32.shape == (B, D)
    assert jnp.allclose(out_f32, ref, atol=1e-4, rtol=1e-4), (
        f"f32 mismatch: max abs err {jnp.max(jnp.abs(out_f32 - ref))}")

    # 2) bf16 (default, perf) path: tight check vs a same-precision jnp
    #    reference, loose check vs the f32 reference (bf16 quantization error).
    prepped = prepare_params(params)                  # bf16 weights by default
    fwd = jax.jit(lambda xi: encoder2_forward(xi, prepped))
    out_bf16 = jax.block_until_ready(fwd(x))
    ref_folded = jax.block_until_ready(encoder2_folded_reference(x, prepped))
    assert out_bf16.shape == (B, D)
    assert jnp.allclose(out_bf16, ref_folded, atol=1e-2, rtol=1e-2), (
        f"bf16 kernel mismatch: {jnp.max(jnp.abs(out_bf16 - ref_folded))}")
    assert jnp.allclose(out_bf16, ref, atol=1e-1, rtol=1e-1), (
        f"bf16 vs f32 ref mismatch: {jnp.max(jnp.abs(out_bf16 - ref))}")

    # 3) Multi-block batch grid (>= 2 blocks, partial last block) + chunked
    #    hidden dim (forces the chunk loop incl. the ragged 32-wide tail).
    B2 = 40
    x2 = jax.random.normal(k_x2, (B2, 1, 7, 7), jnp.float32)
    out2 = jax.block_until_ready(
        encoder2_forward(x2, prepped, hidden_chunk=128))
    ref2 = jax.block_until_ready(encoder2_folded_reference(x2, prepped))
    assert out2.shape == (B2, D)
    assert jnp.allclose(out2, ref2, atol=1e-2, rtol=1e-2), (
        f"chunked/multi-block mismatch: {jnp.max(jnp.abs(out2 - ref2))}")

    print("KERNEL_OK")
</pallas_src>

<mosaic_0001>
module attributes {stable_mosaic.version = 11 : i64} {
  func.func @encoder_fused_kernel(%arg0: i32, %arg1: memref<2x49xf32, #tpu.memory_space<vmem>>, %arg2: memref<49x800xf32, #tpu.memory_space<vmem>>, %arg3: memref<1x800xf32, #tpu.memory_space<vmem>>, %arg4: memref<800x128xf32, #tpu.memory_space<vmem>>, %arg5: memref<1x128xf32, #tpu.memory_space<vmem>>, %arg6: memref<2x128xf32, #tpu.memory_space<vmem>>) attributes {dimension_semantics = [#tpu.dimension_semantics<parallel>], iteration_bounds = array<i64: 1>, scalar_prefetch = 0 : i64, scratch_operands = 0 : i64, tpu.core_type = #tpu.core_type<tc>, window_params = [{transform_indices = @transform_0, window_bounds = array<i64: 2, 49>}, {pipeline_mode = #tpu.pipeline_mode<synchronous>, transform_indices = @transform_1, window_bounds = array<i64: 49, 800>}, {pipeline_mode = #tpu.pipeline_mode<synchronous>, transform_indices = @transform_2, window_bounds = array<i64: 1, 800>}, {pipeline_mode = #tpu.pipeline_mode<synchronous>, transform_indices = @transform_3, window_bounds = array<i64: 800, 128>}, {pipeline_mode = #tpu.pipeline_mode<synchronous>, transform_indices = @transform_4, window_bounds = array<i64: 1, 128>}, {transform_indices = @transform_5, window_bounds = array<i64: 2, 128>}]} {
    %c0 = arith.constant 0 : index
    %c0_0 = arith.constant 0 : index
    %0 = vector.load %arg1[%c0, %c0_0] : memref<2x49xf32, #tpu.memory_space<vmem>>, vector<2x49xf32>
    %cst = arith.constant 0.000000e+00 : f32
    %1 = vector.broadcast %cst : f32 to vector<2x128xf32>
    %c0_1 = arith.constant 0 : index
    %c0_2 = arith.constant 0 : index
    %2 = vector.load %arg2[%c0_1, %c0_2] : memref<49x800xf32, #tpu.memory_space<vmem>>, vector<49x800xf32>
    %cst_3 = arith.constant dense<0.000000e+00> : vector<2x800xf32>
    %3 = tpu.matmul %0, %2, %cst_3 {dimension_numbers = #tpu.dot_dimension_numbers<[1], [0], [0], [1], [0, 0, 1, 1], [], []>} : vector<2x49xf32>, vector<49x800xf32>, vector<2x800xf32> -> vector<2x800xf32>
    %c0_4 = arith.constant 0 : index
    %c0_5 = arith.constant 0 : index
    %4 = vector.load %arg3[%c0_4, %c0_5] : memref<1x800xf32, #tpu.memory_space<vmem>>, vector<1x800xf32>
    %5 = vector.broadcast %4 : vector<1x800xf32> to vector<2x800xf32>
    %6 = arith.addf %3, %5 : vector<2x800xf32>
    %cst_6 = arith.constant 0.000000e+00 : f32
    %7 = vector.broadcast %cst_6 : f32 to vector<2x800xf32>
    %8 = arith.maximumf %6, %7 : vector<2x800xf32>
    %c0_7 = arith.constant 0 : index
    %c0_8 = arith.constant 0 : index
    %9 = vector.load %arg4[%c0_7, %c0_8] : memref<800x128xf32, #tpu.memory_space<vmem>>, vector<800x128xf32>
    %cst_9 = arith.constant dense<0.000000e+00> : vector<2x128xf32>
    %10 = tpu.matmul %8, %9, %cst_9 {dimension_numbers = #tpu.dot_dimension_numbers<[1], [0], [0], [1], [0, 0, 1, 1], [], []>} : vector<2x800xf32>, vector<800x128xf32>, vector<2x128xf32> -> vector<2x128xf32>
    %11 = arith.addf %1, %10 : vector<2x128xf32>
    %c0_10 = arith.constant 0 : index
    %c0_11 = arith.constant 0 : index
    %12 = vector.load %arg5[%c0_10, %c0_11] : memref<1x128xf32, #tpu.memory_space<vmem>>, vector<1x128xf32>
    %13 = vector.broadcast %12 : vector<1x128xf32> to vector<2x128xf32>
    %14 = arith.addf %11, %13 : vector<2x128xf32>
    %cst_12 = arith.constant 0.000000e+00 : f32
    %15 = vector.broadcast %cst_12 : f32 to vector<2x128xf32>
    %16 = arith.maximumf %14, %15 : vector<2x128xf32>
    %c0_13 = arith.constant 0 : index
    %c0_14 = arith.constant 0 : index
    %17 = vector.load %arg6[%c0_13, %c0_14] : memref<2x128xf32, #tpu.memory_space<vmem>>, vector<2x128xf32>
    tpu.vector_store %arg6[%c0_13, %c0_14], %16 {strides = array<i32>} : memref<2x128xf32, #tpu.memory_space<vmem>>, vector<2x128xf32>,
    return
  }
  func.func @transform_0(%arg0: i32) -> (i32, i32) {
    %c0_i32 = arith.constant 0 : i32
    %c0_i32_0 = arith.constant 0 : i32
    return %arg0, %c0_i32 : i32, i32
  }
  func.func @transform_1(%arg0: i32) -> (i32, i32) {
    %c0_i32 = arith.constant 0 : i32
    %c0_i32_0 = arith.constant 0 : i32
    %c0_i32_1 = arith.constant 0 : i32
    return %c0_i32, %c0_i32_0 : i32, i32
  }
  func.func @transform_2(%arg0: i32) -> (i32, i32) {
    %c0_i32 = arith.constant 0 : i32
    %c0_i32_0 = arith.constant 0 : i32
    %c0_i32_1 = arith.constant 0 : i32
    return %c0_i32, %c0_i32_0 : i32, i32
  }
  func.func @transform_3(%arg0: i32) -> (i32, i32) {
    %c0_i32 = arith.constant 0 : i32
    %c0_i32_0 = arith.constant 0 : i32
    %c0_i32_1 = arith.constant 0 : i32
    return %c0_i32, %c0_i32_0 : i32, i32
  }
  func.func @transform_4(%arg0: i32) -> (i32, i32) {
    %c0_i32 = arith.constant 0 : i32
    %c0_i32_0 = arith.constant 0 : i32
    %c0_i32_1 = arith.constant 0 : i32
    return %c0_i32, %c0_i32_0 : i32, i32
  }
  func.func @transform_5(%arg0: i32) -> (i32, i32) {
    %c0_i32 = arith.constant 0 : i32
    %c0_i32_0 = arith.constant 0 : i32
    return %arg0, %c0_i32 : i32, i32
  }
}

</mosaic_0001>

<llo_original>
// kernel: tpu_custom_call.1
$region0: #{tpu_custom_call.1}
  #allocation0 [shape = 'u32[]', space=smem, size = 0x4, offset = 0x4, fixed_abs, tag = 'smem constant byte address 0x4 - core index']
  #allocation1 [shape = 'u32[72,128]{1,0:T(1,128)}', space=vmem, size = 0x9000, scoped, tag = 'internal scratch']
  %s0 = inlined_call_operand.hbm [shape: f32[2,49], index: 0, kind: input, shape index: {}]
  %s1 = inlined_call_operand.hbm [shape: f32[49,800], index: 1, kind: input, shape index: {}]
  %s2 = inlined_call_operand.hbm [shape: f32[1,800], index: 2, kind: input, shape index: {}]
  %s3 = inlined_call_operand.hbm [shape: f32[800,128], index: 3, kind: input, shape index: {}]
  %s4 = inlined_call_operand.vmem [shape: f32[1,128], index: 4, kind: input, shape index: {}]
  %s5 = inlined_call_operand.hbm [shape: f32[2,128], index: 5, kind: output, shape index: {}]
  %s6 = sld [smem:[#allocation0]]
  $region46: #{tpu_custom_call.1} parent=0
    _
  %s8 = ssub.s32 1, %s6
  %s9 = scalar_select 0, %s8, %s6
  $region1: #{tpu_custom_call.1} parent=0
    #allocation2 [shape = 'u8[1024]{0}', space=vmem, size = 0x400, scoped, tag = 'input window, operand 0, single buffered']
    #allocation3 [shape = 's32[1]{0}', space=sflag, size = 0x4, scoped, tag = 'scoped memory for tpu_custom_call.1']
    #allocation4 [shape = 's32[1]{0}', space=sflag, size = 0x4, scoped, tag = 'scoped memory for tpu_custom_call.1']
    #allocation5 [shape = 'u8[200704]{0}', space=vmem, size = 0x31000, scoped, tag = 'input window, operand 1, single buffered']
    #allocation6 [shape = 's32[1]{0}', space=sflag, size = 0x4, scoped, tag = 'scoped memory for tpu_custom_call.1']
    #allocation7 [shape = 'u8[3584]{0}', space=vmem, size = 0x1000, scoped, tag = 'input window, operand 2, single buffered']
    #allocation8 [shape = 'u8[409600]{0}', space=vmem, size = 0x64000, scoped, tag = 'input window, operand 3, single buffered']
    #allocation9 [shape = 's32[1]{0}', space=sflag, size = 0x4, scoped, tag = 'scoped memory for tpu_custom_call.1']
    #allocation10 [shape = 'u8[1024]{0}', space=vmem, size = 0x400, scoped, tag = 'output window, operand 0, single buffered']
    %10 = vsyncpa [#allocation3], 0
    %11 = vsyncpa [#allocation6], 0
    %12 = vsyncpa [#allocation9], 0
    %13 = vsyncpa [#allocation4], 0
    // Predicated region
    $region2: #{tpu_custom_call.1} parent=1 // pred_check
      _
    $region3: #{tpu_custom_call.1} parent=1 // pred_check_branch
      %15 = sbr.rel (0) target = $region5
    $region4: #{tpu_custom_call.1} parent=1 // pred_region
      %17 = vsyncadd [#allocation3], 0
      %s19 = sshll.u32 %s0, 4
      %s20 = int_to_ptr.hbm [resolvable:$true] %s19
      %s21 = sshll.u32 [#allocation2], 4
      %s22 = int_to_ptr.vmem [resolvable:$true] %s21
      %24 = dma.hbm_to_vmem [thread:$0]  %s20, 32, %s22, [#allocation3]
    $region5: #{tpu_custom_call.1} parent=1 // pred_fallthru
      _
    // Predicated region
    $region6: #{tpu_custom_call.1} parent=1 // pred_check
      _
    $region7: #{tpu_custom_call.1} parent=1 // pred_check_branch
      %26 = sbr.rel (0) target = $region9
    $region8: #{tpu_custom_call.1} parent=1 // pred_region
      %28 = vsyncadd [#allocation6], 0
      %s29 = sshll.u32 %s1, 4
      %s30 = int_to_ptr.hbm [resolvable:$true] %s29
      %s31 = sshll.u32 [#allocation5], 4
      %s32 = int_to_ptr.vmem [resolvable:$true] %s31
      %37 = dma.hbm_to_vmem [thread:$0]  %s30, 6272, %s32, [#allocation6], 896, 896, 56
    $region9: #{tpu_custom_call.1} parent=1 // pred_fallthru
      _
    // Predicated region
    $region10: #{tpu_custom_call.1} parent=1 // pred_check
      _
    $region11: #{tpu_custom_call.1} parent=1 // pred_check_branch
      %39 = sbr.rel (0) target = $region13
    $region12: #{tpu_custom_call.1} parent=1 // pred_region
      %41 = vsyncadd [#allocation6], 0
      %s43 = sshll.u32 %s2, 4
      %s44 = int_to_ptr.hbm [resolvable:$true] %s43
      %s45 = sshll.u32 [#allocation7], 4
      %s46 = int_to_ptr.vmem [resolvable:$true] %s45
      %48 = dma.hbm_to_vmem [thread:$0]  %s44, 112, %s46, [#allocation6]
    $region13: #{tpu_custom_call.1} parent=1 // pred_fallthru
      _
    // Predicated region
    $region14: #{tpu_custom_call.1} parent=1 // pred_check
      _
    $region15: #{tpu_custom_call.1} parent=1 // pred_check_branch
      %50 = sbr.rel (0) target = $region17
    $region16: #{tpu_custom_call.1} parent=1 // pred_region
      %52 = vsyncadd [#allocation9], 0
      %s53 = sshll.u32 %s3, 4
      %s54 = int_to_ptr.hbm [resolvable:$true] %s53
      %s55 = sshll.u32 [#allocation8], 4
      %s56 = int_to_ptr.vmem [resolvable:$true] %s55
      %61 = dma.hbm_to_vmem [thread:$0]  %s54, 12800, %s56, [#allocation9], 128, 128, 8
    $region17: #{tpu_custom_call.1} parent=1 // pred_fallthru
      _
    // Predicated region
    $region18: #{tpu_custom_call.1} parent=1 // pred_check
      _
    $region19: #{tpu_custom_call.1} parent=1 // pred_check_branch
      %63 = sbr.rel (0) target = $region21
    $region20: #{tpu_custom_call.1} parent=1 // pred_region
      _
    $region21: #{tpu_custom_call.1} parent=1 // pred_fallthru
      _
    // Predicated region
    $region22: #{tpu_custom_call.1} parent=1 // pred_check
      _
    $region23: #{tpu_custom_call.1} parent=1 // pred_check_branch
      %65 = sbr.rel (0) target = $region25
    $region24: #{tpu_custom_call.1} parent=1 // pred_region
      %67 = dma.done [#allocation3], 32
    $region25: #{tpu_custom_call.1} parent=1 // pred_fallthru
      _
    // Predicated region
    $region26: #{tpu_custom_call.1} parent=1 // pred_check
      _
    $region27: #{tpu_custom_call.1} parent=1 // pred_check_branch
      %69 = sbr.rel (0) target = $region29
    $region28: #{tpu_custom_call.1} parent=1 // pred_region
      %71 = dma.done [#allocation6], 6272
    $region29: #{tpu_custom_call.1} parent=1 // pred_fallthru
      _
    // Predicated region
    $region30: #{tpu_custom_call.1} parent=1 // pred_check
      _
    $region31: #{tpu_custom_call.1} parent=1 // pred_check_branch
      %73 = sbr.rel (0) target = $region33
    $region32: #{tpu_custom_call.1} parent=1 // pred_region
      %75 = dma.done [#allocation6], 112
    $region33: #{tpu_custom_call.1} parent=1 // pred_fallthru
      _
    // Predicated region
    $region34: #{tpu_custom_call.1} parent=1 // pred_check
      _
    $region35: #{tpu_custom_call.1} parent=1 // pred_check_branch
      %77 = sbr.rel (0) target = $region37
    $region36: #{tpu_custom_call.1} parent=1 // pred_region
      %79 = dma.done [#allocation9], 12800
    $region37: #{tpu_custom_call.1} parent=1 // pred_fallthru
      _
    %v80 = vld [vmem:[#allocation2] sm:$0x3]
    %v81 = vld [vmem:[#allocation5] sm:$0xff]
    %v82 = vld [vmem:[#allocation5 + $0x8] sm:$0xff]
    %v83 = vld [vmem:[#allocation5 + $0x10] sm:$0xff]
    %v84 = vld [vmem:[#allocation5 + $0x18] sm:$0xff]
    %v85 = vld [vmem:[#allocation5 + $0x20] sm:$0xff]
    %v86 = vld [vmem:[#allocation5 + $0x28] sm:$0xff]
    %v87 = vld [vmem:[#allocation5 + $0x30] sm:$0xff]
    %v88 = vld [vmem:[#allocation5 + $0x38] sm:$0xff]
    %v89 = vld [vmem:[#allocation5 + $0x40] sm:$0xff]
    %v90 = vld [vmem:[#allocation5 + $0x48] sm:$0xff]
    %v91 = vld [vmem:[#allocation5 + $0x50] sm:$0xff]
    %v92 = vld [vmem:[#allocation5 + $0x58] sm:$0xff]
    %v93 = vld [vmem:[#allocation5 + $0x60] sm:$0xff]
    %v94 = vld [vmem:[#allocation5 + $0x68] sm:$0xff]
    %v95 = vld [vmem:[#allocation5 + $0x70] sm:$0xff]
    %v96 = vld [vmem:[#allocation5 + $0x78] sm:$0xff]
    %v97 = vld [vmem:[#allocation5 + $0x80] sm:$0xff]
    %v98 = vld [vmem:[#allocation5 + $0x88] sm:$0xff]
    %v99 = vld [vmem:[#allocation5 + $0x90] sm:$0xff]
    %v100 = vld [vmem:[#allocation5 + $0x98] sm:$0xff]
    %v101 = vld [vmem:[#allocation5 + $0xa0] sm:$0xff]
    %v102 = vld [vmem:[#allocation5 + $0xa8] sm:$0xff]
    %v103 = vld [vmem:[#allocation5 + $0xb0] sm:$0xff]
    %v104 = vld [vmem:[#allocation5 + $0xb8] sm:$0xff]
    %v105 = vld [vmem:[#allocation5 + $0xc0] sm:$0xff]
    %v106 = vld [vmem:[#allocation5 + $0xc8] sm:$0xff]
    %v107 = vld [vmem:[#allocation5 + $0xd0] sm:$0xff]
    %v108 = vld [vmem:[#allocation5 + $0xd8] sm:$0xff]
    %v109 = vld [vmem:[#allocation5 + $0xe0] sm:$0xff]
    %v110 = vld [vmem:[#allocation5 + $0xe8] sm:$0xff]
    %v111 = vld [vmem:[#allocation5 + $0xf0] sm:$0xff]
    %v112 = vld [vmem:[#allocation5 + $0xf8] sm:$0xff]
    %v113 = vld [vmem:[#allocation5 + $0x100] sm:$0xff]
    %v114 = vld [vmem:[#allocation5 + $0x108] sm:$0xff]
    %v115 = vld [vmem:[#allocation5 + $0x110] sm:$0xff]
    %v116 = vld [vmem:[#allocation5 + $0x118] sm:$0xff]
    %v117 = vld [vmem:[#allocation5 + $0x120] sm:$0xff]
    %v118 = vld [vmem:[#allocation5 + $0x128] sm:$0xff]
    %v119 = vld [vmem:[#allocation5 + $0x130] sm:$0xff]
    %v120 = vld [vmem:[#allocation5 + $0x138] sm:$0xff]
    %v121 = vld [vmem:[#allocation5 + $0x140] sm:$0xff]
    %v122 = vld [vmem:[#allocation5 + $0x148] sm:$0xff]
    %v123 = vld [vmem:[#allocation5 + $0x150] sm:$0x1]
    %v124 = vld [vmem:[#allocation5 + $0x158] sm:$0x1]
    %v125 = vld [vmem:[#allocation5 + $0x160] sm:$0x1]
    %v126 = vld [vmem:[#allocation5 + $0x168] sm:$0x1]
    %v127 = vld [vmem:[#allocation5 + $0x170] sm:$0x1]
    %v128 = vld [vmem:[#allocation5 + $0x178] sm:$0x1]
    %v129 = vld [vmem:[#allocation5 + $0x180] sm:$0x1]
    %v130 = vld [vmem:[#allocation7] sm:$0x7f]
    %v132 = vperm.slane %v130, 0
    %v133 = vperm.slane %v130, 1
    %v134 = vperm.slane %v130, 2
    %v135 = vperm.slane %v130, 3
    %v136 = vperm.slane %v130, 4
    %v137 = vperm.slane %v130, 5
    %v138 = vperm.slane %v130, 6
    %vm146 = vcmask 400384
    %v148 = vsel %vm146, %v80, 0
    %vm150 = vcmask 1040384
    %v152 = vsel %vm150, %v123, 0
    %v155 = vsel %vm150, %v124, 0
    %v158 = vsel %vm150, %v125, 0
    %v161 = vsel %vm150, %v126, 0
    %v164 = vsel %vm150, %v127, 0
    %v167 = vsel %vm150, %v128, 0
    %v170 = vsel %vm150, %v129, 0
    %172 = vmatpush.msra.mxu0 0.0
    %173 = vmatpush.msra.mxu0 0.0
    %174 = vmatpush.msra.mxu0 0.0
    %175 = vmatpush.msra.mxu0 0.0
    %176 = vmatpush.msra.mxu0 0.0
    %177 = vmatpush.msra.mxu0 0.0
    %178 = vmatpush.msra.mxu0 0.0
    %179 = vmatpush.msra.mxu0 0.0
    %180 = vmatpush.msra.mxu0 0.0
    %181 = vmatpush.msra.mxu0 %v152
    %182 = vmatpush.msra.mxu0 %v116
    %183 = vmatpush.msra.mxu0 %v109
    %184 = vmatpush.msra.mxu0 %v102
    %185 = vmatpush.msra.mxu0 %v95
    %186 = vmatpush.msra.mxu0 %v88
    %187 = vmatpush.msra.mxu0 %v81
    %188 = vmatmul.f32.gmra.mxu0 %v148
    %v189 = vpop.f32.mrf.mxu0
    %v190 = vadd.f32 %v132, %v189
    %191 = vdwg.mxu0
    %192 = vmatpush.msra.mxu0 0.0
    %193 = vmatpush.msra.mxu0 0.0
    %194 = vmatpush.msra.mxu0 0.0
    %195 = vmatpush.msra.mxu0 0.0
    %196 = vmatpush.msra.mxu0 0.0
    %197 = vmatpush.msra.mxu0 0.0
    %198 = vmatpush.msra.mxu0 0.0
    %199 = vmatpush.msra.mxu0 0.0
    %200 = vmatpush.msra.mxu0 0.0
    %201 = vmatpush.msra.mxu0 %v155
    %202 = vmatpush.msra.mxu0 %v117
    %203 = vmatpush.msra.mxu0 %v110
    %204 = vmatpush.msra.mxu0 %v103
    %205 = vmatpush.msra.mxu0 %v96
    %206 = vmatpush.msra.mxu0 %v89
    %207 = vmatpush.msra.mxu0 %v82
    %208 = vmatmul.f32.gmra.mxu0 %v148
    %v209 = vpop.f32.mrf.mxu0
    %v210 = vadd.f32 %v133, %v209
    %211 = vdwg.mxu0
    %212 = vmatpush.msra.mxu0 0.0
    %213 = vmatpush.msra.mxu0 0.0
    %214 = vmatpush.msra.mxu0 0.0
    %215 = vmatpush.msra.mxu0 0.0
    %216 = vmatpush.msra.mxu0 0.0
    %217 = vmatpush.msra.mxu0 0.0
    %218 = vmatpush.msra.mxu0 0.0
    %219 = vmatpush.msra.mxu0 0.0
    %220 = vmatpush.msra.mxu0 0.0
    %221 = vmatpush.msra.mxu0 %v158
    %222 = vmatpush.msra.mxu0 %v118
    %223 = vmatpush.msra.mxu0 %v111
    %224 = vmatpush.msra.mxu0 %v104
    %225 = vmatpush.msra.mxu0 %v97
    %226 = vmatpush.msra.mxu0 %v90
    %227 = vmatpush.msra.mxu0 %v83
    %228 = vmatmul.f32.gmra.mxu0 %v148
    %v229 = vpop.f32.mrf.mxu0
    %v230 = vadd.f32 %v134, %v229
    %231 = vdwg.mxu0
    %232 = vmatpush.msra.mxu0 0.0
    %233 = vmatpush.msra.mxu0 0.0
    %234 = vmatpush.msra.mxu0 0.0
    %235 = vmatpush.msra.mxu0 0.0
    %236 = vmatpush.msra.mxu0 0.0
    %237 = vmatpush.msra.mxu0 0.0
    %238 = vmatpush.msra.mxu0 0.0
    %239 = vmatpush.msra.mxu0 0.0
    %240 = vmatpush.msra.mxu0 0.0
    %241 = vmatpush.msra.mxu0 %v161
    %242 = vmatpush.msra.mxu0 %v119
    %243 = vmatpush.msra.mxu0 %v112
    %244 = vmatpush.msra.mxu0 %v105
    %245 = vmatpush.msra.mxu0 %v98
    %246 = vmatpush.msra.mxu0 %v91
    %247 = vmatpush.msra.mxu0 %v84
    %248 = vmatmul.f32.gmra.mxu0 %v148
    %v249 = vpop.f32.mrf.mxu0
    %v250 = vadd.f32 %v135, %v249
    %251 = vdwg.mxu0
    %252 = vmatpush.msra.mxu0 0.0
    %253 = vmatpush.msra.mxu0 0.0
    %254 = vmatpush.msra.mxu0 0.0
    %255 = vmatpush.msra.mxu0 0.0
    %256 = vmatpush.msra.mxu0 0.0
    %257 = vmatpush.msra.mxu0 0.0
    %258 = vmatpush.msra.mxu0 0.0
    %259 = vmatpush.msra.mxu0 0.0
    %260 = vmatpush.msra.mxu0 0.0
    %261 = vmatpush.msra.mxu0 %v164
    %262 = vmatpush.msra.mxu0 %v120
    %263 = vmatpush.msra.mxu0 %v113
    %264 = vmatpush.msra.mxu0 %v106
    %265 = vmatpush.msra.mxu0 %v99
    %266 = vmatpush.msra.mxu0 %v92
    %267 = vmatpush.msra.mxu0 %v85
    %268 = vmatmul.f32.gmra.mxu0 %v148
    %v269 = vpop.f32.mrf.mxu0
    %v270 = vadd.f32 %v136, %v269
    %271 = vdwg.mxu0
    %272 = vmatpush.msra.mxu0 0.0
    %273 = vmatpush.msra.mxu0 0.0
    %274 = vmatpush.msra.mxu0 0.0
    %275 = vmatpush.msra.mxu0 0.0
    %276 = vmatpush.msra.mxu0 0.0
    %277 = vmatpush.msra.mxu0 0.0
    %278 = vmatpush.msra.mxu0 0.0
    %279 = vmatpush.msra.mxu0 0.0
    %280 = vmatpush.msra.mxu0 0.0
    %281 = vmatpush.msra.mxu0 %v167
    %282 = vmatpush.msra.mxu0 %v121
    %283 = vmatpush.msra.mxu0 %v114
    %284 = vmatpush.msra.mxu0 %v107
    %285 = vmatpush.msra.mxu0 %v100
    %286 = vmatpush.msra.mxu0 %v93
    %287 = vmatpush.msra.mxu0 %v86
    %288 = vmatmul.f32.gmra.mxu0 %v148
    %v289 = vpop.f32.mrf.mxu0
    %v290 = vadd.f32 %v137, %v289
    %291 = vdwg.mxu0
    %292 = vmatpush.msra.mxu0 0.0
    %293 = vmatpush.msra.mxu0 0.0
    %294 = vmatpush.msra.mxu0 0.0
    %295 = vmatpush.msra.mxu0 0.0
    %296 = vmatpush.msra.mxu0 0.0
    %297 = vmatpush.msra.mxu0 0.0
    %298 = vmatpush.msra.mxu0 0.0
    %299 = vmatpush.msra.mxu0 0.0
    %300 = vmatpush.msra.mxu0 0.0
    %301 = vmatpush.msra.mxu0 %v170
    %302 = vmatpush.msra.mxu0 %v122
    %303 = vmatpush.msra.mxu0 %v115
    %304 = vmatpush.msra.mxu0 %v108
    %305 = vmatpush.msra.mxu0 %v101
    %306 = vmatpush.msra.mxu0 %v94
    %307 = vmatpush.msra.mxu0 %v87
    %308 = vmatmul.f32.gmra.mxu0 %v148
    %v309 = vpop.f32.mrf.mxu0
    %v310 = vadd.f32 %v138, %v309
    %311 = vdwg.mxu0
    %v312 = vmax.f32 %v190, 0.0
    %v313 = vmax.f32 %v210, 0.0
    %v314 = vmax.f32 %v230, 0.0
    %v315 = vmax.f32 %v250, 0.0
    %v316 = vmax.f32 %v270, 0.0
    %v317 = vmax.f32 %v290, 0.0
    %v318 = vmax.f32 %v310, 0.0
    %v319 = vld [vmem:[#allocation8] sm:$0xff]
    %v320 = vld [vmem:[#allocation8 + $0x8] sm:$0xff]
    %v321 = vld [vmem:[#allocation8 + $0x10] sm:$0xff]
    %v322 = vld [vmem:[#allocation8 + $0x18] sm:$0xff]
    %v323 = vld [vmem:[#allocation8 + $0x20] sm:$0xff]
    %v324 = vld [vmem:[#allocation8 + $0x28] sm:$0xff]
    %v325 = vld [vmem:[#allocation8 + $0x30] sm:$0xff]
    %v326 = vld [vmem:[#allocation8 + $0x38] sm:$0xff]
    %v327 = vld [vmem:[#allocation8 + $0x40] sm:$0xff]
    %v328 = vld [vmem:[#allocation8 + $0x48] sm:$0xff]
    %v329 = vld [vmem:[#allocation8 + $0x50] sm:$0xff]
    %v330 = vld [vmem:[#allocation8 + $0x58] sm:$0xff]
    %v331 = vld [vmem:[#allocation8 + $0x60] sm:$0xff]
    %v332 = vld [vmem:[#allocation8 + $0x68] sm:$0xff]
    %v333 = vld [vmem:[#allocation8 + $0x70] sm:$0xff]
    %v334 = vld [vmem:[#allocation8 + $0x78] sm:$0xff]
    %v335 = vld [vmem:[#allocation8 + $0x80] sm:$0xff]
    %v336 = vld [vmem:[#allocation8 + $0x88] sm:$0xff]
    %v337 = vld [vmem:[#allocation8 + $0x90] sm:$0xff]
    %v338 = vld [vmem:[#allocation8 + $0x98] sm:$0xff]
    %v339 = vld [vmem:[#allocation8 + $0xa0] sm:$0xff]
    %v340 = vld [vmem:[#allocation8 + $0xa8] sm:$0xff]
    %v341 = vld [vmem:[#allocation8 + $0xb0] sm:$0xff]
    %v342 = vld [vmem:[#allocation8 + $0xb8] sm:$0xff]
    %v343 = vld [vmem:[#allocation8 + $0xc0] sm:$0xff]
    %v344 = vld [vmem:[#allocation8 + $0xc8] sm:$0xff]
    %v345 = vld [vmem:[#allocation8 + $0xd0] sm:$0xff]
    %v346 = vld [vmem:[#allocation8 + $0xd8] sm:$0xff]
    %v347 = vld [vmem:[#allocation8 + $0xe0] sm:$0xff]
    %v348 = vld [vmem:[#allocation8 + $0xe8] sm:$0xff]
    %v349 = vld [vmem:[#allocation8 + $0xf0] sm:$0xff]
    %v350 = vld [vmem:[#allocation8 + $0xf8] sm:$0xff]
    %v351 = vld [vmem:[#allocation8 + $0x100] sm:$0xff]
    %v352 = vld [vmem:[#allocation8 + $0x108] sm:$0xff]
    %v353 = vld [vmem:[#allocation8 + $0x110] sm:$0xff]
    %v354 = vld [vmem:[#allocation8 + $0x118] sm:$0xff]
    %v355 = vld [vmem:[#allocation8 + $0x120] sm:$0xff]
    %v356 = vld [vmem:[#allocation8 + $0x128] sm:$0xff]
    %v357 = vld [vmem:[#allocation8 + $0x130] sm:$0xff]
    %v358 = vld [vmem:[#allocation8 + $0x138] sm:$0xff]
    %v359 = vld [vmem:[#allocation8 + $0x140] sm:$0xff]
    %v360 = vld [vmem:[#allocation8 + $0x148] sm:$0xff]
    %v361 = vld [vmem:[#allocation8 + $0x150] sm:$0xff]
    %v362 = vld [vmem:[#allocation8 + $0x158] sm:$0xff]
    %v363 = vld [vmem:[#allocation8 + $0x160] sm:$0xff]
    %v364 = vld [vmem:[#allocation8 + $0x168] sm:$0xff]
    %v365 = vld [vmem:[#allocation8 + $0x170] sm:$0xff]
    %v366 = vld [vmem:[#allocation8 + $0x178] sm:$0xff]
    %v367 = vld [vmem:[#allocation8 + $0x180] sm:$0xff]
    %v368 = vld [vmem:[#allocation8 + $0x188] sm:$0xff]
    %v369 = vld [vmem:[#allocation8 + $0x190] sm:$0xff]
    %v370 = vld [vmem:[#allocation8 + $0x198] sm:$0xff]
    %v371 = vld [vmem:[#allocation8 + $0x1a0] sm:$0xff]
    %v372 = vld [vmem:[#allocation8 + $0x1a8] sm:$0xff]
    %v373 = vld [vmem:[#allocation8 + $0x1b0] sm:$0xff]
    %v374 = vld [vmem:[#allocation8 + $0x1b8] sm:$0xff]
    %v375 = vld [vmem:[#allocation8 + $0x1c0] sm:$0xff]
    %v376 = vld [vmem:[#allocation8 + $0x1c8] sm:$0xff]
    %v377 = vld [vmem:[#allocation8 + $0x1d0] sm:$0xff]
    %v378 = vld [vmem:[#allocation8 + $0x1d8] sm:$0xff]
    %v379 = vld [vmem:[#allocation8 + $0x1e0] sm:$0xff]
    %v380 = vld [vmem:[#allocation8 + $0x1e8] sm:$0xff]
    %v381 = vld [vmem:[#allocation8 + $0x1f0] sm:$0xff]
    %v382 = vld [vmem:[#allocation8 + $0x1f8] sm:$0xff]
    %v383 = vld [vmem:[#allocation8 + $0x200] sm:$0xff]
    %v384 = vld [vmem:[#allocation8 + $0x208] sm:$0xff]
    %v385 = vld [vmem:[#allocation8 + $0x210] sm:$0xff]
    %v386 = vld [vmem:[#allocation8 + $0x218] sm:$0xff]
    %v387 = vld [vmem:[#allocation8 + $0x220] sm:$0xff]
    %v388 = vld [vmem:[#allocation8 + $0x228] sm:$0xff]
    %v389 = vld [vmem:[#allocation8 + $0x230] sm:$0xff]
    %v390 = vld [vmem:[#allocation8 + $0x238] sm:$0xff]
    %v391 = vld [vmem:[#allocation8 + $0x240] sm:$0xff]
    %v392 = vld [vmem:[#allocation8 + $0x248] sm:$0xff]
    %v393 = vld [vmem:[#allocation8 + $0x250] sm:$0xff]
    %v394 = vld [vmem:[#allocation8 + $0x258] sm:$0xff]
    %v395 = vld [vmem:[#allocation8 + $0x260] sm:$0xff]
    %v396 = vld [vmem:[#allocation8 + $0x268] sm:$0xff]
    %v397 = vld [vmem:[#allocation8 + $0x270] sm:$0xff]
    %v398 = vld [vmem:[#allocation8 + $0x278] sm:$0xff]
    %v399 = vld [vmem:[#allocation8 + $0x280] sm:$0xff]
    %v400 = vld [vmem:[#allocation8 + $0x288] sm:$0xff]
    %v401 = vld [vmem:[#allocation8 + $0x290] sm:$0xff]
    %v402 = vld [vmem:[#allocation8 + $0x298] sm:$0xff]
    %v403 = vld [vmem:[#allocation8 + $0x2a0] sm:$0xff]
    %v404 = vld [vmem:[#allocation8 + $0x2a8] sm:$0xff]
    %v405 = vld [vmem:[#allocation8 + $0x2b0] sm:$0xff]
    %v406 = vld [vmem:[#allocation8 + $0x2b8] sm:$0xff]
    %v407 = vld [vmem:[#allocation8 + $0x2c0] sm:$0xff]
    %v408 = vld [vmem:[#allocation8 + $0x2c8] sm:$0xff]
    %v409 = vld [vmem:[#allocation8 + $0x2d0] sm:$0xff]
    %v410 = vld [vmem:[#allocation8 + $0x2d8] sm:$0xff]
    %v411 = vld [vmem:[#allocation8 + $0x2e0] sm:$0xff]
    %v412 = vld [vmem:[#allocation8 + $0x2e8] sm:$0xff]
    %v413 = vld [vmem:[#allocation8 + $0x2f0] sm:$0xff]
    %v414 = vld [vmem:[#allocation8 + $0x2f8] sm:$0xff]
    %v415 = vld [vmem:[#allocation8 + $0x300] sm:$0xff]
    %v416 = vld [vmem:[#allocation8 + $0x308] sm:$0xff]
    %v417 = vld [vmem:[#allocation8 + $0x310] sm:$0xff]
    %v418 = vld [vmem:[#allocation8 + $0x318] sm:$0xff]
    %v419 = vld [vmem:[%s4] sm:$0x1]
    %v421 = vperm.slane %v419, 0
    %vm423 = vcmask 261120
    %v425 = vsel %vm423, %v318, 0
    %427 = vmatpush.msra.mxu0 %v334
    %428 = vmatpush.msra.mxu0 %v333
    %429 = vmatpush.msra.mxu0 %v332
    %430 = vmatpush.msra.mxu0 %v331
    %431 = vmatpush.msra.mxu0 %v330
    %432 = vmatpush.msra.mxu0 %v329
    %433 = vmatpush.msra.mxu0 %v328
    %434 = vmatpush.msra.mxu0 %v327
    %435 = vmatpush.msra.mxu0 %v326
    %436 = vmatpush.msra.mxu0 %v325
    %437 = vmatpush.msra.mxu0 %v324
    %438 = vmatpush.msra.mxu0 %v323
    %439 = vmatpush.msra.mxu0 %v322
    %440 = vmatpush.msra.mxu0 %v321
    %441 = vmatpush.msra.mxu0 %v320
    %442 = vmatpush.msra.mxu0 %v319
    %443 = vmatmul.f32.gmra.mxu0 %v312
    %v444 = vpop.f32.mrf.mxu0
    %v445 = vadd.f32 %v421, %v444
    %446 = vdwg.mxu0
    %447 = vmatpush.msra.mxu0 %v350
    %448 = vmatpush.msra.mxu0 %v349
    %449 = vmatpush.msra.mxu0 %v348
    %450 = vmatpush.msra.mxu0 %v347
    %451 = vmatpush.msra.mxu0 %v346
    %452 = vmatpush.msra.mxu0 %v345
    %453 = vmatpush.msra.mxu0 %v344
    %454 = vmatpush.msra.mxu0 %v343
    %455 = vmatpush.msra.mxu0 %v342
    %456 = vmatpush.msra.mxu0 %v341
    %457 = vmatpush.msra.mxu0 %v340
    %458 = vmatpush.msra.mxu0 %v339
    %459 = vmatpush.msra.mxu0 %v338
    %460 = vmatpush.msra.mxu0 %v337
    %461 = vmatpush.msra.mxu0 %v336
    %462 = vmatpush.msra.mxu0 %v335
    %463 = vmatmul.f32.gmra.mxu0 %v313
    %v464 = vpop.f32.mrf.mxu0
    %v465 = vadd.f32 %v445, %v464
    %466 = vdwg.mxu0
    %467 = vmatpush.msra.mxu0 %v366
    %468 = vmatpush.msra.mxu0 %v365
    %469 = vmatpush.msra.mxu0 %v364
    %470 = vmatpush.msra.mxu0 %v363
    %471 = vmatpush.msra.mxu0 %v362
    %472 = vmatpush.msra.mxu0 %v361
    %473 = vmatpush.msra.mxu0 %v360
    %474 = vmatpush.msra.mxu0 %v359
    %475 = vmatpush.msra.mxu0 %v358
    %476 = vmatpush.msra.mxu0 %v357
    %477 = vmatpush.msra.mxu0 %v356
    %478 = vmatpush.msra.mxu0 %v355
    %479 = vmatpush.msra.mxu0 %v354
    %480 = vmatpush.msra.mxu0 %v353
    %481 = vmatpush.msra.mxu0 %v352
    %482 = vmatpush.msra.mxu0 %v351
    %483 = vmatmul.f32.gmra.mxu0 %v314
    %v484 = vpop.f32.mrf.mxu0
    %v485 = vadd.f32 %v465, %v484
    %486 = vdwg.mxu0
    %487 = vmatpush.msra.mxu0 %v382
    %488 = vmatpush.msra.mxu0 %v381
    %489 = vmatpush.msra.mxu0 %v380
    %490 = vmatpush.msra.mxu0 %v379
    %491 = vmatpush.msra.mxu0 %v378
    %492 = vmatpush.msra.mxu0 %v377
    %493 = vmatpush.msra.mxu0 %v376
    %494 = vmatpush.msra.mxu0 %v375
    %495 = vmatpush.msra.mxu0 %v374
    %496 = vmatpush.msra.mxu0 %v373
    %497 = vmatpush.msra.mxu0 %v372
    %498 = vmatpush.msra.mxu0 %v371
    %499 = vmatpush.msra.mxu0 %v370
    %500 = vmatpush.msra.mxu0 %v369
    %501 = vmatpush.msra.mxu0 %v368
    %502 = vmatpush.msra.mxu0 %v367
    %503 = vmatmul.f32.gmra.mxu0 %v315
    %v504 = vpop.f32.mrf.mxu0
    %v505 = vadd.f32 %v485, %v504
    %506 = vdwg.mxu0
    %507 = vmatpush.msra.mxu0 %v398
    %508 = vmatpush.msra.mxu0 %v397
    %509 = vmatpush.msra.mxu0 %v396
    %510 = vmatpush.msra.mxu0 %v395
    %511 = vmatpush.msra.mxu0 %v394
    %512 = vmatpush.msra.mxu0 %v393
    %513 = vmatpush.msra.mxu0 %v392
    %514 = vmatpush.msra.mxu0 %v391
    %515 = vmatpush.msra.mxu0 %v390
    %516 = vmatpush.msra.mxu0 %v389
    %517 = vmatpush.msra.mxu0 %v388
    %518 = vmatpush.msra.mxu0 %v387
    %519 = vmatpush.msra.mxu0 %v386
    %520 = vmatpush.msra.mxu0 %v385
    %521 = vmatpush.msra.mxu0 %v384
    %522 = vmatpush.msra.mxu0 %v383
    %523 = vmatmul.f32.gmra.mxu0 %v316
    %v524 = vpop.f32.mrf.mxu0
    %v525 = vadd.f32 %v505, %v524
    %526 = vdwg.mxu0
    %527 = vmatpush.msra.mxu0 %v414
    %528 = vmatpush.msra.mxu0 %v413
    %529 = vmatpush.msra.mxu0 %v412
    %530 = vmatpush.msra.mxu0 %v411
    %531 = vmatpush.msra.mxu0 %v410
    %532 = vmatpush.msra.mxu0 %v409
    %533 = vmatpush.msra.mxu0 %v408
    %534 = vmatpush.msra.mxu0 %v407
    %535 = vmatpush.msra.mxu0 %v406
    %536 = vmatpush.msra.mxu0 %v405
    %537 = vmatpush.msra.mxu0 %v404
    %538 = vmatpush.msra.mxu0 %v403
    %539 = vmatpush.msra.mxu0 %v402
    %540 = vmatpush.msra.mxu0 %v401
    %541 = vmatpush.msra.mxu0 %v400
    %542 = vmatpush.msra.mxu0 %v399
    %543 = vmatmul.f32.gmra.mxu0 %v317
    %v544 = vpop.f32.mrf.mxu0
    %v545 = vadd.f32 %v525, %v544
    %546 = vdwg.mxu0
    %547 = vmatpush.msra.mxu0 0.0
    %548 = vmatpush.msra.mxu0 0.0
    %549 = vmatpush.msra.mxu0 0.0
    %550 = vmatpush.msra.mxu0 0.0
    %551 = vmatpush.msra.mxu0 0.0
    %552 = vmatpush.msra.mxu0 0.0
    %553 = vmatpush.msra.mxu0 0.0
    %554 = vmatpush.msra.mxu0 0.0
    %555 = vmatpush.msra.mxu0 0.0
    %556 = vmatpush.msra.mxu0 0.0
    %557 = vmatpush.msra.mxu0 0.0
    %558 = vmatpush.msra.mxu0 0.0
    %559 = vmatpush.msra.mxu0 %v418
    %560 = vmatpush.msra.mxu0 %v417
    %561 = vmatpush.msra.mxu0 %v416
    %562 = vmatpush.msra.mxu0 %v415
    %563 = vmatmul.f32.gmra.mxu0 %v425
    %v564 = vpop.f32.mrf.mxu0
    %v565 = vadd.f32 %v545, %v564
    %566 = vdwg.mxu0
    %v567 = vmax.f32 %v565, 0.0
    %568 = vst [vmem:[#allocation10] sm:$0x3] %v567
    // Predicated region
    $region38: #{tpu_custom_call.1} parent=1 // pred_check
      _
    $region39: #{tpu_custom_call.1} parent=1 // pred_check_branch
      %570 = sbr.rel (0) target = $region41
    $region40: #{tpu_custom_call.1} parent=1 // pred_region
      %572 = vsyncadd [#allocation4], 0
      %s574 = sshll.u32 [#allocation10], 4
      %s575 = int_to_ptr.vmem [resolvable:$true] %s574
      %s576 = sshll.u32 %s5, 4
      %s577 = int_to_ptr.hbm [resolvable:$true] %s576
      %579 = dma.vmem_to_hbm [thread:$0]  %s575, 32, %s577, [#allocation4]
    $region41: #{tpu_custom_call.1} parent=1 // pred_fallthru
      _
    // Predicated region
    $region42: #{tpu_custom_call.1} parent=1 // pred_check
      _
    $region43: #{tpu_custom_call.1} parent=1 // pred_check_branch
      %581 = sbr.rel (0) target = $region45
    $region44: #{tpu_custom_call.1} parent=1 // pred_region
      %583 = dma.done [#allocation4], 32
    $region45: #{tpu_custom_call.1} parent=1 // pred_fallthru
      _
    %584 = vsyncpa [#allocation3], 1
    %585 = vsyncpa [#allocation6], 1
    %586 = vsyncpa [#allocation9], 1
    %587 = vsyncpa [#allocation4], 1

</llo_original>
